<compile_context>
chip_gen: v7x
topology: tpu7x:2x2x1
jax: 0.10.0
libtpu: 0.0.40
codegen_flags: <defaults>
</compile_context>

<pallas_src>
import dataclasses

import jax
import jax.numpy as jnp
from jax.experimental import pallas as pl
from jax.experimental.pallas import tpu as pltpu


def _round_up(x: int, m: int) -> int:
    return ((x + m - 1) // m) * m


def _vmem_limit_bytes() -> int:
    # ~3/4 of physical VMEM per generation: ~96 MiB on v5e/v6e, ~48 MiB on v7x.
    try:
        cap = pltpu.get_tpu_info().vmem_capacity_bytes
        return int(min(cap * 3 // 4, 96 * 1024 * 1024))
    except Exception:
        return 48 * 1024 * 1024  # conservative fallback, safe on v5e/v6e/v7x


# ----------------------------- kernels --------------------------------------


def _logreg_tiled_kernel(x_ref, wt_ref, b_ref, o_ref):
    # x_ref: [tm, tk] (f32/bf16), wt_ref: [tk, tn] (f32/bf16),
    # b_ref: [1, tn] f32, o_ref: [tm, tn] f32.
    # o_ref's block index (i, j) is constant across the k (reduction) axis, so
    # it is VMEM-resident and doubles as the accumulator. Bias is folded into
    # the k == 0 init, so there is no epilogue.
    @pl.when(pl.program_id(2) == 0)
    def _():
        o_ref[...] = jnp.broadcast_to(b_ref[...], o_ref.shape)

    o_ref[...] += jnp.dot(
        x_ref[...], wt_ref[...], preferred_element_type=jnp.float32
    )


def _logreg_small_kernel(x_ref, wt_ref, b_ref, o_ref):
    # Single-block fast path: whole problem in VMEM, no grid, no padding.
    o_ref[...] = (
        jnp.dot(x_ref[...], wt_ref[...], preferred_element_type=jnp.float32)
        + b_ref[...]
    ).astype(o_ref.dtype)


# -------------------------- parameter prep -----------------------------------


@dataclasses.dataclass(frozen=True, eq=False)
class LogRegParams:
    hidden: int
    num_classes: int
    operand_dtype: object
    # fast-path (unpadded) parameters
    w_t: jax.Array      # [H, C], operand dtype
    b2d: jax.Array      # [1, C], f32
    # tiled-path (padded) parameters + tile config
    w_t_pad: jax.Array  # [H_pad, C_pad], operand dtype
    b2d_pad: jax.Array  # [1, C_pad], f32
    tn: int
    tk: int
    h_pad: int
    c_pad: int


def prepare_params(weight, bias, *, operand_dtype=jnp.float32) -> LogRegParams:
    """Hoist per-call work: transpose / cast / pad W and bias once at init."""
    C, H = weight.shape
    assert bias.shape == (C,)

    w_t = weight.T.astype(operand_dtype)              # [H, C]
    b2d = bias.astype(jnp.float32).reshape(1, C)

    # Tile config for the tiled path: a single class tile (tn = padded C) for
    # modest C so x is streamed from HBM exactly once; large tk for fewer,
    # fatter reduction steps.
    tn = _round_up(min(C, 2048), 128)
    tk = _round_up(min(H, 1024), 128)
    c_pad = _round_up(C, tn)
    h_pad = _round_up(H, tk)

    w_t_pad = jnp.pad(w_t, ((0, h_pad - H), (0, c_pad - C)))
    b2d_pad = jnp.pad(b2d, ((0, 0), (0, c_pad - C)))

    return LogRegParams(
        hidden=H, num_classes=C, operand_dtype=operand_dtype,
        w_t=w_t, b2d=b2d, w_t_pad=w_t_pad, b2d_pad=b2d_pad,
        tn=tn, tk=tk, h_pad=h_pad, c_pad=c_pad,
    )


# ------------------------------ forward --------------------------------------


def logreg_forward(x, params: LogRegParams, *, tm: int = 256):
    """x: [N, H] -> [N, C] f32 (= x @ W.T + b), matching nn.Linear forward."""
    N, H = x.shape
    assert H == params.hidden
    C = params.num_classes

    x = x.astype(params.operand_dtype)

    # Small-shape fast path: one VMEM block, no padding / slicing / grid.
    if N <= 256 and H <= 1024 and C <= 512:
        # TODO(synk): at the production-tiny 8x32x16 size even this call is
        # launch-overhead dominated; fuse with the downstream softmax/loss.
        return pl.pallas_call(
            _logreg_small_kernel,
            out_shape=jax.ShapeDtypeStruct((N, C), jnp.float32),
        )(x, params.w_t, params.b2d)

    tn, tk = params.tn, params.tk
    tm = min(tm, _round_up(N, 8))
    n_pad = _round_up(N, tm)

    # Only x is padded per call (activations are runtime); W/bias were padded
    # once in prepare_params. Zero H-padding contributes 0 to the contraction.
    x_p = jnp.pad(x, ((0, n_pad - N), (0, params.h_pad - H)))

    grid = (n_pad // tm, params.c_pad // tn, params.h_pad // tk)

    out_p = pl.pallas_call(
        _logreg_tiled_kernel,
        out_shape=jax.ShapeDtypeStruct((n_pad, params.c_pad), jnp.float32),
        grid_spec=pltpu.PrefetchScalarGridSpec(
            num_scalar_prefetch=0,
            grid=grid,
            in_specs=[
                pl.BlockSpec((tm, tk), lambda i, j, k: (i, k)),   # x tile
                pl.BlockSpec((tk, tn), lambda i, j, k: (k, j)),   # W.T tile
                pl.BlockSpec((1, tn), lambda i, j, k: (0, j)),    # bias tile
            ],
            out_specs=pl.BlockSpec((tm, tn), lambda i, j, k: (i, j)),
        ),
        compiler_params=pltpu.CompilerParams(
            dimension_semantics=("parallel", "parallel", "arbitrary"),
            vmem_limit_bytes=_vmem_limit_bytes(),
        ),
    )(x_p, params.w_t_pad, params.b2d_pad)

    return out_p[:N, :C]


# ------------------------------- test ----------------------------------------


if __name__ == "__main__":
    key = jax.random.PRNGKey(0)
    k_x, k_w, k_b, k_x2 = jax.random.split(key, 4)

    # --- production-like tiny shape (exercises the single-block fast path) ---
    batch, hidden_channels, num_classes = 8, 32, 16
    bound = 1.0 / (hidden_channels ** 0.5)
    weight = jax.random.uniform(
        k_w, (num_classes, hidden_channels), jnp.float32, -bound, bound
    )
    bias = jax.random.uniform(k_b, (num_classes,), jnp.float32, -bound, bound)
    x = jax.random.normal(k_x, (batch, hidden_channels), jnp.float32)

    params = prepare_params(weight, bias)          # f32 operands: exact parity
    out = jax.block_until_ready(logreg_forward(x, params))
    ref = x @ weight.T + bias
    assert out.shape == (batch, num_classes)
    assert jnp.allclose(out, ref, atol=1e-5, rtol=1e-5), "small/f32 mismatch"

    # --- larger shape: exercises the tiled path (f32 and bf16 operands) ---
    N2, H2, C2 = 512, 2048, 384
    bound2 = 1.0 / (H2 ** 0.5)
    k_w2, k_b2 = jax.random.split(k_w)
    w2 = jax.random.uniform(k_w2, (C2, H2), jnp.float32, -bound2, bound2)
    b2 = jax.random.uniform(k_b2, (C2,), jnp.float32, -bound2, bound2)
    x2 = jax.random.normal(k_x2, (N2, H2), jnp.float32)
    ref2 = jnp.dot(x2, w2.T, precision="highest") + b2

    out2_f32 = jax.block_until_ready(logreg_forward(x2, prepare_params(w2, b2)))
    assert out2_f32.shape == (N2, C2)
    assert jnp.allclose(out2_f32, ref2, atol=2e-2, rtol=2e-2), "tiled/f32 mismatch"

    out2_bf16 = jax.block_until_ready(
        logreg_forward(x2, prepare_params(w2, b2, operand_dtype=jnp.bfloat16))
    )
    assert jnp.allclose(out2_bf16, ref2, atol=5e-2, rtol=5e-2), "tiled/bf16 mismatch"

    print("KERNEL_OK")
</pallas_src>

<mosaic_0001>
module attributes {stable_mosaic.version = 11 : i64} {
  func.func @_logreg_small_kernel(%arg0: memref<8x32xf32, #tpu.memory_space<vmem>>, %arg1: memref<32x16xf32, #tpu.memory_space<vmem>>, %arg2: memref<1x16xf32, #tpu.memory_space<vmem>>, %arg3: memref<8x16xf32, #tpu.memory_space<vmem>>) attributes {dimension_semantics = [], scalar_prefetch = 0 : i64, scratch_operands = 0 : i64, tpu.core_type = #tpu.core_type<tc>} {
    %c0 = arith.constant 0 : index
    %c0_0 = arith.constant 0 : index
    %0 = vector.load %arg0[%c0, %c0_0] : memref<8x32xf32, #tpu.memory_space<vmem>>, vector<8x32xf32>
    %c0_1 = arith.constant 0 : index
    %c0_2 = arith.constant 0 : index
    %1 = vector.load %arg1[%c0_1, %c0_2] : memref<32x16xf32, #tpu.memory_space<vmem>>, vector<32x16xf32>
    %cst = arith.constant dense<0.000000e+00> : vector<8x16xf32>
    %2 = tpu.matmul %0, %1, %cst {dimension_numbers = #tpu.dot_dimension_numbers<[1], [0], [0], [1], [0, 0, 1, 1], [], []>} : vector<8x32xf32>, vector<32x16xf32>, vector<8x16xf32> -> vector<8x16xf32>
    %c0_3 = arith.constant 0 : index
    %c0_4 = arith.constant 0 : index
    %3 = vector.load %arg2[%c0_3, %c0_4] : memref<1x16xf32, #tpu.memory_space<vmem>>, vector<1x16xf32>
    %4 = vector.broadcast %3 : vector<1x16xf32> to vector<8x16xf32>
    %5 = arith.addf %2, %4 : vector<8x16xf32>
    %c0_5 = arith.constant 0 : index
    %c0_6 = arith.constant 0 : index
    %6 = vector.load %arg3[%c0_5, %c0_6] : memref<8x16xf32, #tpu.memory_space<vmem>>, vector<8x16xf32>
    tpu.vector_store %arg3[%c0_5, %c0_6], %5 {strides = array<i32>} : memref<8x16xf32, #tpu.memory_space<vmem>>, vector<8x16xf32>,
    return
  }
}

</mosaic_0001>

<llo_original>
// kernel: tpu_custom_call.1
$region0: #{tpu_custom_call.1}
  #allocation0 [shape = 'u32[]', space=smem, size = 0x4, offset = 0x4, fixed_abs, tag = 'smem constant byte address 0x4 - core index']
  #allocation1 [shape = 'u32[144,128]{1,0:T(1,128)}', space=vmem, size = 0x12000, scoped, tag = 'internal scratch']
  %s0 = inlined_call_operand.vmem [shape: f32[8,32], index: 0, kind: input, shape index: {}]
  %s1 = inlined_call_operand.vmem [shape: f32[32,16], index: 1, kind: input, shape index: {}]
  %s2 = inlined_call_operand.vmem [shape: f32[1,16], index: 2, kind: input, shape index: {}]
  %s3 = inlined_call_operand.hbm [shape: f32[8,16], index: 3, kind: output, shape index: {}]
  %s4 = sld [smem:[#allocation0]]
  $region22: #{tpu_custom_call.1} parent=0
    _
  %s6 = ssub.s32 1, %s4
  %s7 = scalar_select 0, %s6, %s4
  $region1: #{tpu_custom_call.1} parent=0
    #allocation2 [shape = 'u8[4096]{0}', space=vmem, size = 0x1000, scoped, tag = 'output window, operand 0, single buffered']
    #allocation3 [shape = 's32[1]{0}', space=sflag, size = 0x4, scoped, tag = 'scoped memory for tpu_custom_call.1']
    %8 = vsyncpa [#allocation3], 0
    // Predicated region
    $region2: #{tpu_custom_call.1} parent=1 // pred_check
      _
    $region3: #{tpu_custom_call.1} parent=1 // pred_check_branch
      %10 = sbr.rel (0) target = $region5
    $region4: #{tpu_custom_call.1} parent=1 // pred_region
      _
    $region5: #{tpu_custom_call.1} parent=1 // pred_fallthru
      _
    // Predicated region
    $region6: #{tpu_custom_call.1} parent=1 // pred_check
      _
    $region7: #{tpu_custom_call.1} parent=1 // pred_check_branch
      %12 = sbr.rel (0) target = $region9
    $region8: #{tpu_custom_call.1} parent=1 // pred_region
      _
    $region9: #{tpu_custom_call.1} parent=1 // pred_fallthru
      _
    // Predicated region
    $region10: #{tpu_custom_call.1} parent=1 // pred_check
      _
    $region11: #{tpu_custom_call.1} parent=1 // pred_check_branch
      %14 = sbr.rel (0) target = $region13
    $region12: #{tpu_custom_call.1} parent=1 // pred_region
      _
    $region13: #{tpu_custom_call.1} parent=1 // pred_fallthru
      _
    %v15 = vld [vmem:[%s0] sm:$0xff]
    %v16 = vld [vmem:[%s1] sm:$0xff]
    %v17 = vld [vmem:[%s1 + $0x8] sm:$0xff]
    %v18 = vld [vmem:[%s1 + $0x10] sm:$0xff]
    %v19 = vld [vmem:[%s1 + $0x18] sm:$0xff]
    %v20 = vld [vmem:[%s2] sm:$0x1]
    %v22 = vlaneseq
    %v23 = vshrl.u32 %v22, 7
    %v24 = vsub.s32 0, %v23
    %v25 = vrot.slane %v20, %v24
    %vm27 = vcmask 261120
    %v29 = vsel %vm27, %v15, 0
    %31 = vmatprep.subr.mxu0 0.0
    %32 = vmatpush1.msra.mxu0 %v16
    %33 = vmatprep.subr.mxu0 0.0
    %34 = vmatpush1.msra.mxu0 %v17
    %35 = vmatprep.subr.mxu0 0.0
    %36 = vmatpush1.msra.mxu0 %v18
    %37 = vmatprep.subr.mxu0 0.0
    %38 = vmatpush1.msra.mxu0 %v19
    %39 = vmatprep.subr.mxu0 0.0
    %40 = vmatpush1.msra.mxu0 0.0
    %41 = vmatprep.subr.mxu0 0.0
    %42 = vmatpush1.msra.mxu0 0.0
    %43 = vmatprep.subr.mxu0 0.0
    %44 = vmatpush1.msra.mxu0 0.0
    %45 = vmatprep.subr.mxu0 0.0
    %46 = vmatpush1.msra.mxu0 0.0
    %47 = vmatprep.subr.mxu0 0.0
    %48 = vmatpush1.msra.mxu0 0.0
    %49 = vmatprep.subr.mxu0 0.0
    %50 = vmatpush1.msra.mxu0 0.0
    %51 = vmatprep.subr.mxu0 0.0
    %52 = vmatpush1.msra.mxu0 0.0
    %53 = vmatprep.subr.mxu0 0.0
    %54 = vmatpush1.msra.mxu0 0.0
    %55 = vmatprep.subr.mxu0 0.0
    %56 = vmatpush1.msra.mxu0 0.0
    %57 = vmatprep.subr.mxu0 0.0
    %58 = vmatpush1.msra.mxu0 0.0
    %59 = vmatprep.subr.mxu0 0.0
    %60 = vmatpush1.msra.mxu0 0.0
    %61 = vmatprep.subr.mxu0 0.0
    %62 = vmatpush1.msra.mxu0 0.0
    %63 = vmatprep.subr.mxu0 0.0
    %64 = vmatpush1.msra.mxu0 0.0
    %65 = vmatprep.subr.mxu0 0.0
    %66 = vmatpush1.msra.mxu0 0.0
    %67 = vmatprep.subr.mxu0 0.0
    %68 = vmatpush1.msra.mxu0 0.0
    %69 = vmatprep.subr.mxu0 0.0
    %70 = vmatpush1.msra.mxu0 0.0
    %71 = vmatprep.subr.mxu0 0.0
    %72 = vmatpush1.msra.mxu0 0.0
    %73 = vmatprep.subr.mxu0 0.0
    %74 = vmatpush1.msra.mxu0 0.0
    %75 = vmatprep.subr.mxu0 0.0
    %76 = vmatpush1.msra.mxu0 0.0
    %77 = vmatprep.subr.mxu0 0.0
    %78 = vmatpush1.msra.mxu0 0.0
    %79 = vmatprep.subr.mxu0 0.0
    %80 = vmatpush1.msra.mxu0 0.0
    %81 = vmatprep.subr.mxu0 0.0
    %82 = vmatpush1.msra.mxu0 0.0
    %83 = vmatprep.subr.mxu0 0.0
    %84 = vmatpush1.msra.mxu0 0.0
    %85 = vmatprep.subr.mxu0 0.0
    %86 = vmatpush1.msra.mxu0 0.0
    %87 = vmatprep.subr.mxu0 0.0
    %88 = vmatpush1.msra.mxu0 0.0
    %89 = vmatprep.subr.mxu0 0.0
    %90 = vmatpush1.msra.mxu0 0.0
    %91 = vmatprep.subr.mxu0 0.0
    %92 = vmatpush1.msra.mxu0 0.0
    %93 = vmatprep.subr.mxu0 0.0
    %94 = vmatpush1.msra.mxu0 0.0
    %95 = vmatprep.mubr.f32.mxu0 0.0
    %96 = vmatmul.mubr.f32.gmra.mrb[0].mxu0 %v29
    %v97 = vpop.f32.mrb[0].mxu0
    %v98 = vadd.f32 %v25, %v97
    %v99 = vpop.f32.mrb[0].mxu0
    %100 = vdwg.mxu0
    %vm101 = vcmask 130048
    %102 = vst.msk [vmem:[#allocation2] sm:$0xff] %vm101, %v98
    // Predicated region
    $region14: #{tpu_custom_call.1} parent=1 // pred_check
      _
    $region15: #{tpu_custom_call.1} parent=1 // pred_check_branch
      %104 = sbr.rel (0) target = $region17
    $region16: #{tpu_custom_call.1} parent=1 // pred_region
      %s106 = ssub.s32 128, 128
      %107 = vsyncadd [#allocation3], %s106
      %s109 = sshll.u32 [#allocation2], 4
      %s110 = int_to_ptr.vmem [resolvable:$true] %s109
      %112 = dma.vmem_to_hbm [thread:$0]  %s110, 128, %s3, [#allocation3]
    $region17: #{tpu_custom_call.1} parent=1 // pred_fallthru
      _
    // Predicated region
    $region18: #{tpu_custom_call.1} parent=1 // pred_check
      _
    $region19: #{tpu_custom_call.1} parent=1 // pred_check_branch
      %114 = sbr.rel (0) target = $region21
    $region20: #{tpu_custom_call.1} parent=1 // pred_region
      %115 = dma.done [#allocation3], 128
    $region21: #{tpu_custom_call.1} parent=1 // pred_fallthru
      _
    %116 = vsyncpa [#allocation3], 1

</llo_original>
